<compile_context>
chip_gen: v6e
topology: v6e:2x2x1
jax: 0.10.0
libtpu: 0.0.40
codegen_flags: <defaults>
</compile_context>

<pallas_src>
import functools
import math

import jax
import jax.numpy as jnp
from jax.experimental import pallas as pl
from jax.experimental.pallas import tpu as pltpu

# Fits v7x's 64 MiB physical VMEM with headroom; well under v5e/v6e's 128 MiB.
VMEM_LIMIT = 48 * 1024 * 1024


# --------------------------------------------------------------------------
# Tiling helper
# --------------------------------------------------------------------------

def _pick_tile(dim, preferred, granule):
    """Largest multiple of `granule` that divides `dim` and is <= preferred;
    falls back to the full dim (legal: full-extent block) when none exists."""
    if dim <= preferred:
        return dim
    t = (preferred // granule) * granule
    while t >= granule:
        if dim % t == 0:
            return t
        t -= granule
    return dim


# --------------------------------------------------------------------------
# Tiled linear (matmul + bias [+ ReLU]) with f32 accumulator
# --------------------------------------------------------------------------

def _linear_kernel(x_ref, w_ref, b_ref, o_ref, acc_ref, *, activation):
    @pl.when(pl.program_id(2) == 0)
    def _():
        acc_ref[...] = jnp.zeros_like(acc_ref)

    acc_ref[...] += jnp.dot(x_ref[...], w_ref[...],
                            preferred_element_type=jnp.float32)

    @pl.when(pl.program_id(2) == pl.num_programs(2) - 1)
    def _():
        out = acc_ref[...] + b_ref[...]                        # f32 epilogue
        if activation == "relu":
            out = jnp.maximum(out, 0.0)
        o_ref[...] = out.astype(o_ref.dtype)                   # cast last


def linear(x, w, b, activation=None, out_dtype=jnp.bfloat16):
    """x: [M, K] bf16, w: [K, N] bf16, b: [1, N] f32 -> [M, N] out_dtype."""
    M, K = x.shape
    Kw, N = w.shape
    assert Kw == K
    tm = _pick_tile(M, 512, 16)     # 16-row granule: bf16 packs 16 sublanes/vreg
    tn = _pick_tile(N, 512, 128)
    tk = _pick_tile(K, 512, 128)
    grid = (M // tm, N // tn, K // tk)
    return pl.pallas_call(
        functools.partial(_linear_kernel, activation=activation),
        out_shape=jax.ShapeDtypeStruct((M, N), out_dtype),
        grid_spec=pltpu.PrefetchScalarGridSpec(
            num_scalar_prefetch=0,
            grid=grid,
            in_specs=[
                pl.BlockSpec((tm, tk), lambda i, j, k: (i, k)),
                pl.BlockSpec((tk, tn), lambda i, j, k: (k, j)),
                pl.BlockSpec((1, tn), lambda i, j, k: (0, j)),
            ],
            out_specs=pl.BlockSpec((tm, tn), lambda i, j, k: (i, j)),
            scratch_shapes=[pltpu.VMEM((tm, tn), jnp.float32)],
        ),
        compiler_params=pltpu.CompilerParams(
            dimension_semantics=("parallel", "parallel", "arbitrary"),
            vmem_limit_bytes=VMEM_LIMIT,
        ),
    )(x, w, b)


# --------------------------------------------------------------------------
# Linear with fused residual-add + LayerNorm epilogue (tn == N == H)
# --------------------------------------------------------------------------

def _linear_res_ln_kernel(x_ref, w_ref, b_ref, r_ref, g_ref, bb_ref, o_ref,
                          acc_ref, *, eps):
    @pl.when(pl.program_id(1) == 0)
    def _():
        acc_ref[...] = jnp.zeros_like(acc_ref)

    acc_ref[...] += jnp.dot(x_ref[...], w_ref[...],
                            preferred_element_type=jnp.float32)

    @pl.when(pl.program_id(1) == pl.num_programs(1) - 1)
    def _():
        y = acc_ref[...] + b_ref[...] + r_ref[...].astype(jnp.float32)
        mean = jnp.mean(y, axis=-1, keepdims=True)
        var = jnp.mean((y - mean) ** 2, axis=-1, keepdims=True)  # biased (PyTorch)
        yn = (y - mean) * jax.lax.rsqrt(var + eps)
        o_ref[...] = (yn * g_ref[...] + bb_ref[...]).astype(o_ref.dtype)


def linear_residual_ln(x, w, b, residual, gamma, beta, eps=1e-5,
                       out_dtype=jnp.bfloat16):
    """LayerNorm(residual + x @ w + b).  N is NOT tiled (LN needs the full
    output row), so this is only used for projections whose N == hidden."""
    M, K = x.shape
    Kw, N = w.shape
    assert Kw == K and residual.shape == (M, N)
    tm = _pick_tile(M, 256, 16)     # kept modest: full-width N lives in VMEM
    tk = _pick_tile(K, 512, 128)
    grid = (M // tm, K // tk)
    return pl.pallas_call(
        functools.partial(_linear_res_ln_kernel, eps=eps),
        out_shape=jax.ShapeDtypeStruct((M, N), out_dtype),
        grid_spec=pltpu.PrefetchScalarGridSpec(
            num_scalar_prefetch=0,
            grid=grid,
            in_specs=[
                pl.BlockSpec((tm, tk), lambda i, k: (i, k)),   # x
                pl.BlockSpec((tk, N), lambda i, k: (k, 0)),    # w
                pl.BlockSpec((1, N), lambda i, k: (0, 0)),     # bias
                pl.BlockSpec((tm, N), lambda i, k: (i, 0)),    # residual
                pl.BlockSpec((1, N), lambda i, k: (0, 0)),     # gamma
                pl.BlockSpec((1, N), lambda i, k: (0, 0)),     # beta
            ],
            out_specs=pl.BlockSpec((tm, N), lambda i, k: (i, 0)),
            scratch_shapes=[pltpu.VMEM((tm, N), jnp.float32)],
        ),
        compiler_params=pltpu.CompilerParams(
            dimension_semantics=("parallel", "arbitrary"),
            vmem_limit_bytes=VMEM_LIMIT,
        ),
    )(x, w, b, residual, gamma, beta)


# --------------------------------------------------------------------------
# Multi-head attention: one grid step per batch, heads sliced on lanes,
# bf16 into the MXU, lane-dense [T, H] output tile.
# --------------------------------------------------------------------------

def _attn_heads(qkv, bias, heads, dh, scale, out_dtype):
    H = heads * dh
    outs = []
    for h in range(heads):
        q = qkv[:, h * dh:(h + 1) * dh]                        # [T, dh] bf16
        k = qkv[:, H + h * dh:H + (h + 1) * dh]
        v = qkv[:, 2 * H + h * dh:2 * H + (h + 1) * dh]
        # q @ k^T without an explicit transpose; bf16 operands, f32 accumulate.
        s = jax.lax.dot_general(q, k, (((1,), (1,)), ((), ())),
                                preferred_element_type=jnp.float32) * scale
        if bias is not None:
            s = s + bias                                       # [1, T] broadcast
        s = s - jnp.max(s, axis=-1, keepdims=True)
        p = jnp.exp(s)
        p = p * pl.reciprocal(jnp.sum(p, axis=-1, keepdims=True), approx=True)
        outs.append(jnp.dot(p.astype(v.dtype), v,              # bf16 PV matmul
                            preferred_element_type=jnp.float32))
    return jnp.concatenate(outs, axis=-1).astype(out_dtype)    # [T, H]


def _attn_kernel(qkv_ref, o_ref, *, heads, dh, scale):
    o_ref[0] = _attn_heads(qkv_ref[0], None, heads, dh, scale, o_ref.dtype)


def _attn_kernel_masked(qkv_ref, bias_ref, o_ref, *, heads, dh, scale):
    o_ref[0] = _attn_heads(qkv_ref[0], bias_ref[0], heads, dh, scale,
                           o_ref.dtype)


def attention(qkv, heads, dh, bias=None):
    """qkv: [B, T, 3H] bf16 (lanes = q | k | v); bias: None or [B, 1, T] f32
    additive mask bias.  Returns [B, T, H] bf16 (heads concatenated on lanes).
    """
    B, T, threeH = qkv.shape
    H = heads * dh
    assert threeH == 3 * H
    scale = 1.0 / math.sqrt(dh)
    cp = pltpu.CompilerParams(dimension_semantics=("parallel",),
                              vmem_limit_bytes=VMEM_LIMIT)
    qkv_spec = pl.BlockSpec((1, T, 3 * H), lambda b: (b, 0, 0))
    out_spec = pl.BlockSpec((1, T, H), lambda b: (b, 0, 0))
    out_shape = jax.ShapeDtypeStruct((B, T, H), qkv.dtype)
    # TODO(synk): long-T / v7x: convert to flash (online softmax, KV grid axis)
    # and, for very small B on v7x, use grid=(B, heads) so both TCs get work.
    if bias is None:
        return pl.pallas_call(
            functools.partial(_attn_kernel, heads=heads, dh=dh, scale=scale),
            out_shape=out_shape,
            grid=(B,),
            in_specs=[qkv_spec],
            out_specs=out_spec,
            compiler_params=cp,
        )(qkv)
    return pl.pallas_call(
        functools.partial(_attn_kernel_masked, heads=heads, dh=dh, scale=scale),
        out_shape=out_shape,
        grid=(B,),
        in_specs=[qkv_spec, pl.BlockSpec((1, 1, T), lambda b: (b, 0, 0))],
        out_specs=out_spec,
        compiler_params=cp,
    )(qkv, bias)


# --------------------------------------------------------------------------
# Parameters & model glue
# --------------------------------------------------------------------------

def sinusoid_pe(max_len, H):
    pos = jnp.arange(max_len, dtype=jnp.float32)[:, None]
    i = jnp.arange(H, dtype=jnp.float32)[None, :]
    angle = pos / jnp.power(10000.0, (2.0 * jnp.floor(i / 2.0)) / H)
    return jnp.where((jnp.arange(H) % 2) == 0, jnp.sin(angle), jnp.cos(angle))


def init_params(key, vocab, hidden, heads, ffn, n_layers, max_len=64):
    def nrm(k, shape, scale=0.02):
        return (scale * jax.random.normal(k, shape)).astype(jnp.bfloat16)

    keys = jax.random.split(key, 2 + n_layers)
    emb = jax.random.normal(keys[0], (vocab, hidden)).astype(jnp.bfloat16)
    emb = emb.at[0].set(0)                                   # padding_idx=0
    params = {
        "emb": emb,
        "alpha": jnp.float32(1.0),
        "n_heads": heads,
        "pe": sinusoid_pe(max_len, hidden),                  # hoisted PE (f32)
        "w_out": nrm(keys[1], (hidden, vocab)),
        "b_out": jnp.zeros((1, vocab), jnp.float32),
        "layers": [],
    }
    for li in range(n_layers):
        ks = jax.random.split(keys[2 + li], 4)
        params["layers"].append({
            # Fused QKV projection: [H, 3H] ordered q | k | v.
            "wqkv": nrm(ks[0], (hidden, 3 * hidden)),
            "bqkv": jnp.zeros((1, 3 * hidden), jnp.float32),
            "wo": nrm(ks[1], (hidden, hidden)),
            "bo": jnp.zeros((1, hidden), jnp.float32),
            "ln1_g": jnp.ones((1, hidden), jnp.float32),
            "ln1_b": jnp.zeros((1, hidden), jnp.float32),
            "w1": nrm(ks[2], (hidden, ffn)),
            "b1": jnp.zeros((1, ffn), jnp.float32),
            "w2": nrm(ks[3], (ffn, hidden)),
            "b2": jnp.zeros((1, hidden), jnp.float32),
            "ln2_g": jnp.ones((1, hidden), jnp.float32),
            "ln2_b": jnp.zeros((1, hidden), jnp.float32),
        })
    return params


def transformer_lm_forward(params, text_input, text_mask=None):
    B, T = text_input.shape
    H = params["emb"].shape[1]
    heads = params["n_heads"]
    dh = H // heads

    # Embedding lookup (XLA glue; padding row 0 is zero) + precomputed PE.
    # TODO(synk): confirm whether the reference Encoder scales embeddings by
    # sqrt(H) before adding PE (Encoder body unavailable).
    emb = jnp.take(params["emb"], text_input, axis=0)                 # [B,T,H]
    pe = (params["alpha"] * params["pe"][:T]).astype(jnp.bfloat16)
    x2 = (emb + pe[None]).reshape(B * T, H).astype(jnp.bfloat16)

    # Mirrors the PyTorch forward: text_mask=None -> unmasked attention.
    bias = None
    if text_mask is not None:
        m = text_mask.reshape(B, 1, T)
        bias = jnp.where(m != 0, 0.0, -1e9).astype(jnp.float32)

    for lyr in params["layers"]:
        # --- multi-head self-attention (fused QKV projection) ---
        qkv = linear(x2, lyr["wqkv"], lyr["bqkv"])                    # [B*T,3H]
        o = attention(qkv.reshape(B, T, 3 * H), heads, dh, bias=bias) # [B,T,H]
        o = o.reshape(B * T, H)                                       # free
        # WO projection with residual + LayerNorm fused into the epilogue.
        x2 = linear_residual_ln(o, lyr["wo"], lyr["bo"], x2,
                                lyr["ln1_g"], lyr["ln1_b"])
        # --- position-wise FFN; FFN2 with residual + LN fused ---
        h = linear(x2, lyr["w1"], lyr["b1"], activation="relu")
        x2 = linear_residual_ln(h, lyr["w2"], lyr["b2"], x2,
                                lyr["ln2_g"], lyr["ln2_b"])

    # TODO(synk): emit f32 logits instead if the downstream loss needs it.
    logits = linear(x2, params["w_out"], params["b_out"],
                    out_dtype=jnp.bfloat16)                           # [B*T,V]
    return logits.reshape(B, T, -1)


# --------------------------------------------------------------------------

if __name__ == "__main__":
    VOCAB, HIDDEN, HEADS, FFN, LAYERS = 48, 32, 4, 64, 2
    B, T = 2, 8

    key = jax.random.PRNGKey(0)
    pkey, dkey = jax.random.split(key)
    params = init_params(pkey, VOCAB, HIDDEN, HEADS, FFN, LAYERS, max_len=64)

    text_input = jax.random.randint(dkey, (B, T), 0, VOCAB, dtype=jnp.int32)

    prediction = transformer_lm_forward(params, text_input, text_mask=None)
    jax.block_until_ready(prediction)
    assert prediction.shape == (B, T, VOCAB)
    assert bool(jnp.all(jnp.isfinite(prediction.astype(jnp.float32))))
    print("KERNEL_OK")
</pallas_src>

<mosaic_0001>
module attributes {stable_mosaic.version = 11 : i64} {
  func.func @_linear_kernel(%arg0: i32, %arg1: i32, %arg2: i32, %arg3: memref<16x32xbf16, #tpu.memory_space<vmem>>, %arg4: memref<32x96xbf16, #tpu.memory_space<vmem>>, %arg5: memref<1x96xf32, #tpu.memory_space<vmem>>, %arg6: memref<16x96xbf16, #tpu.memory_space<vmem>>, %arg7: memref<16x96xf32, #tpu.memory_space<vmem>>) attributes {dimension_semantics = [#tpu.dimension_semantics<parallel>, #tpu.dimension_semantics<parallel>, #tpu.dimension_semantics<arbitrary>], iteration_bounds = array<i64: 1, 1, 1>, scalar_prefetch = 0 : i64, scratch_operands = 1 : i64, tpu.core_type = #tpu.core_type<tc>, window_params = [{transform_indices = @transform_0, window_bounds = array<i64: 16, 32>}, {transform_indices = @transform_1, window_bounds = array<i64: 32, 96>}, {transform_indices = @transform_2, window_bounds = array<i64: 1, 96>}, {transform_indices = @transform_3, window_bounds = array<i64: 16, 96>}]} {
    %c0_i32 = arith.constant 0 : i32
    %0 = arith.cmpi eq, %arg2, %c0_i32 : i32
    %1 = arith.extui %0 : i1 to i32
    %c0_i32_0 = arith.constant 0 : i32
    %2 = arith.cmpi ne, %1, %c0_i32_0 : i32
    scf.if %2 {
      %cst_10 = arith.constant 0.000000e+00 : f32
      %12 = vector.broadcast %cst_10 : f32 to vector<16x96xf32>
      %c0_11 = arith.constant 0 : index
      %c0_12 = arith.constant 0 : index
      %13 = vector.load %arg7[%c0_11, %c0_12] : memref<16x96xf32, #tpu.memory_space<vmem>>, vector<16x96xf32>
      tpu.vector_store %arg7[%c0_11, %c0_12], %12 {strides = array<i32>} : memref<16x96xf32, #tpu.memory_space<vmem>>, vector<16x96xf32>,
    } else {
    }
    %c0 = arith.constant 0 : index
    %c0_1 = arith.constant 0 : index
    %3 = vector.load %arg7[%c0, %c0_1] : memref<16x96xf32, #tpu.memory_space<vmem>>, vector<16x96xf32>
    %c0_2 = arith.constant 0 : index
    %c0_3 = arith.constant 0 : index
    %4 = vector.load %arg3[%c0_2, %c0_3] : memref<16x32xbf16, #tpu.memory_space<vmem>>, vector<16x32xbf16>
    %c0_4 = arith.constant 0 : index
    %c0_5 = arith.constant 0 : index
    %5 = vector.load %arg4[%c0_4, %c0_5] : memref<32x96xbf16, #tpu.memory_space<vmem>>, vector<32x96xbf16>
    %cst = arith.constant dense<0.000000e+00> : vector<16x96xf32>
    %6 = tpu.matmul %4, %5, %cst {dimension_numbers = #tpu.dot_dimension_numbers<[1], [0], [0], [1], [0, 0, 1, 1], [], []>} : vector<16x32xbf16>, vector<32x96xbf16>, vector<16x96xf32> -> vector<16x96xf32>
    %7 = arith.addf %3, %6 : vector<16x96xf32>
    %c0_6 = arith.constant 0 : index
    %c0_7 = arith.constant 0 : index
    %8 = vector.load %arg7[%c0_6, %c0_7] : memref<16x96xf32, #tpu.memory_space<vmem>>, vector<16x96xf32>
    tpu.vector_store %arg7[%c0_6, %c0_7], %7 {strides = array<i32>} : memref<16x96xf32, #tpu.memory_space<vmem>>, vector<16x96xf32>,
    %c0_i32_8 = arith.constant 0 : i32
    %9 = arith.cmpi eq, %arg2, %c0_i32_8 : i32
    %10 = arith.extui %9 : i1 to i32
    %c0_i32_9 = arith.constant 0 : i32
    %11 = arith.cmpi ne, %10, %c0_i32_9 : i32
    scf.if %11 {
      %c0_10 = arith.constant 0 : index
      %c0_11 = arith.constant 0 : index
      %12 = vector.load %arg7[%c0_10, %c0_11] : memref<16x96xf32, #tpu.memory_space<vmem>>, vector<16x96xf32>
      %c0_12 = arith.constant 0 : index
      %c0_13 = arith.constant 0 : index
      %13 = vector.load %arg5[%c0_12, %c0_13] : memref<1x96xf32, #tpu.memory_space<vmem>>, vector<1x96xf32>
      %14 = vector.broadcast %13 : vector<1x96xf32> to vector<16x96xf32>
      %15 = arith.addf %12, %14 : vector<16x96xf32>
      %16 = arith.truncf %15 : vector<16x96xf32> to vector<16x96xbf16>
      %c0_14 = arith.constant 0 : index
      %c0_15 = arith.constant 0 : index
      %17 = vector.load %arg6[%c0_14, %c0_15] : memref<16x96xbf16, #tpu.memory_space<vmem>>, vector<16x96xbf16>
      tpu.vector_store %arg6[%c0_14, %c0_15], %16 {strides = array<i32>} : memref<16x96xbf16, #tpu.memory_space<vmem>>, vector<16x96xbf16>,
    } else {
    }
    return
  }
  func.func @transform_0(%arg0: i32, %arg1: i32, %arg2: i32) -> (i32, i32) {
    %c0_i32 = arith.constant 0 : i32
    return %arg0, %arg2 : i32, i32
  }
  func.func @transform_1(%arg0: i32, %arg1: i32, %arg2: i32) -> (i32, i32) {
    %c0_i32 = arith.constant 0 : i32
    return %arg2, %arg1 : i32, i32
  }
  func.func @transform_2(%arg0: i32, %arg1: i32, %arg2: i32) -> (i32, i32) {
    %c0_i32 = arith.constant 0 : i32
    %c0_i32_0 = arith.constant 0 : i32
    return %c0_i32, %arg1 : i32, i32
  }
  func.func @transform_3(%arg0: i32, %arg1: i32, %arg2: i32) -> (i32, i32) {
    %c0_i32 = arith.constant 0 : i32
    return %arg0, %arg1 : i32, i32
  }
}

</mosaic_0001>

<llo_original>
// kernel: tpu_custom_call.1
$region0: #{tpu_custom_call.1}
  #allocation0 [shape = 'u32[]', space=smem, size = 0x4, offset = 0x4, fixed_abs, tag = 'smem constant byte address 0x4 - core index']
  #allocation1 [shape = 'u32[144,128]{1,0:T(1,128)}', space=vmem, size = 0x12000, scoped, tag = 'internal scratch']
  #allocation2 [shape = 'f32[16,96]{1,0:T(8,128)}', space=vmem, size = 0x2000, scoped, tag = 'scratch operand']
  %s0 = inlined_call_operand.hbm [shape: bf16[16,32], index: 0, kind: input, shape index: {}]
  %s1 = inlined_call_operand.hbm [shape: bf16[32,96], index: 1, kind: input, shape index: {}]
  %s2 = inlined_call_operand.vmem [shape: f32[1,96], index: 2, kind: input, shape index: {}]
  %s3 = inlined_call_operand.hbm [shape: bf16[16,96], index: 3, kind: output, shape index: {}]
  %s4 = sld [smem:[#allocation0]]
  $region38: #{tpu_custom_call.1} parent=0
    _
  %s6 = ssub.s32 1, %s4
  %s7 = scalar_select 0, %s6, %s4
  $region1: #{tpu_custom_call.1} parent=0
    #allocation3 [shape = 'u8[4096]{0}', space=vmem, size = 0x1000, scoped, tag = 'input window, operand 0, single buffered']
    #allocation4 [shape = 's32[1]{0}', space=sflag, size = 0x4, scoped, tag = 'scoped memory for tpu_custom_call.1']
    #allocation5 [shape = 's32[1]{0}', space=sflag, size = 0x4, scoped, tag = 'scoped memory for tpu_custom_call.1']
    #allocation6 [shape = 'u8[8192]{0}', space=vmem, size = 0x2000, scoped, tag = 'input window, operand 1, single buffered']
    #allocation7 [shape = 's32[1]{0}', space=sflag, size = 0x4, scoped, tag = 'scoped memory for tpu_custom_call.1']
    #allocation8 [shape = 'u8[4096]{0}', space=vmem, size = 0x1000, scoped, tag = 'output window, operand 0, single buffered']
    %8 = vsyncpa [#allocation4], 0
    %9 = vsyncpa [#allocation7], 0
    %10 = vsyncpa [#allocation5], 0
    // Predicated region
    $region2: #{tpu_custom_call.1} parent=1 // pred_check
      _
    $region3: #{tpu_custom_call.1} parent=1 // pred_check_branch
      %12 = sbr.rel (0) target = $region5
    $region4: #{tpu_custom_call.1} parent=1 // pred_region
      %s14 = ssub.s32 128, 128
      %15 = vsyncadd [#allocation4], %s14
      %s16 = sshll.u32 [#allocation3], 4
      %s17 = int_to_ptr.vmem [resolvable:$true] %s16
      %22 = dma.hbm_to_vmem [thread:$0]  %s0, 128, %s17, [#allocation4], 64, 64, 4
    $region5: #{tpu_custom_call.1} parent=1 // pred_fallthru
      _
    // Predicated region
    $region6: #{tpu_custom_call.1} parent=1 // pred_check
      _
    $region7: #{tpu_custom_call.1} parent=1 // pred_check_branch
      %24 = sbr.rel (0) target = $region9
    $region8: #{tpu_custom_call.1} parent=1 // pred_region
      %s26 = ssub.s32 256, 256
      %27 = vsyncadd [#allocation7], %s26
      %s28 = sshll.u32 [#allocation6], 4
      %s29 = int_to_ptr.vmem [resolvable:$true] %s28
      %34 = dma.hbm_to_vmem [thread:$0]  %s1, 256, %s29, [#allocation7], 64, 64, 4
    $region9: #{tpu_custom_call.1} parent=1 // pred_fallthru
      _
    // Predicated region
    $region10: #{tpu_custom_call.1} parent=1 // pred_check
      _
    $region11: #{tpu_custom_call.1} parent=1 // pred_check_branch
      %36 = sbr.rel (0) target = $region13
    $region12: #{tpu_custom_call.1} parent=1 // pred_region
      _
    $region13: #{tpu_custom_call.1} parent=1 // pred_fallthru
      _
    // Predicated region
    $region14: #{tpu_custom_call.1} parent=1 // pred_check
      _
    $region15: #{tpu_custom_call.1} parent=1 // pred_check_branch
      %38 = sbr.rel (0) target = $region17
    $region16: #{tpu_custom_call.1} parent=1 // pred_region
      %39 = dma.done [#allocation4], 128
    $region17: #{tpu_custom_call.1} parent=1 // pred_fallthru
      _
    // Predicated region
    $region18: #{tpu_custom_call.1} parent=1 // pred_check
      _
    $region19: #{tpu_custom_call.1} parent=1 // pred_check_branch
      %41 = sbr.rel (0) target = $region21
    $region20: #{tpu_custom_call.1} parent=1 // pred_region
      %42 = dma.done [#allocation7], 256
    $region21: #{tpu_custom_call.1} parent=1 // pred_fallthru
      _
    %p44 = scmp.eq.s32.totalorder 0, 0
    // Predicated region
    $region22: #{tpu_custom_call.1} parent=1 // pred_check
      %p45 = pneg %p44
    $region23: #{tpu_custom_call.1} parent=1 // pred_check_branch
      %47 = sbr.rel (%p45) target = $region25
    $region24: #{tpu_custom_call.1} parent=1 // pred_region
      %vm48 = vcmask 785408
      %49 = vst.msk [vmem:[#allocation2] sm:$0xff] %vm48, 0.0
      %50 = vst.msk [vmem:[#allocation2 + $0x8] sm:$0xff] %vm48, 0.0
    $region25: #{tpu_custom_call.1} parent=1 // pred_fallthru
      _
    %v51 = vld [vmem:[#allocation2] sm:$0xff]
    %v52 = vld [vmem:[#allocation2 + $0x8] sm:$0xff]
    %v53 = vld [vmem:[#allocation3] sm:$0xf]
    %v54 = vld [vmem:[#allocation3 + $0x4] sm:$0xf]
    %v55 = vld [vmem:[#allocation6] sm:$0xf]
    %v56 = vld [vmem:[#allocation6 + $0x4] sm:$0xf]
    %v57 = vld [vmem:[#allocation6 + $0x8] sm:$0xf]
    %v58 = vld [vmem:[#allocation6 + $0xc] sm:$0xf]
    %v61 = vunpack.c.l.b16 %v53
    %v62 = vunpack.c.l.b16 %v54
    %v63 = vpack.c.b16 %v62, %v61
    %v68 = vunpack.c.l.b16 %v55
    %v69 = vunpack.c.l.b16 %v56
    %v70 = vunpack.c.l.b16 %v57
    %v71 = vunpack.c.l.b16 %v58
    %v72 = vpack.c.b16 %v69, %v68
    %v73 = vpack.c.b16 %v71, %v70
    %vm76 = vcmask 261120
    %v78 = vsel %vm76, %v63, 0
    %80 = vmatprep.subr.bf16.mxu0 0
    %81 = vmatpush1.bf16.msra.mxu0 0
    %82 = vmatprep.subr.bf16.mxu0 0
    %83 = vmatpush1.bf16.msra.mxu0 0
    %84 = vmatprep.subr.bf16.mxu0 0
    %85 = vmatpush1.bf16.msra.mxu0 0
    %86 = vmatprep.subr.bf16.mxu0 0
    %87 = vmatpush1.bf16.msra.mxu0 0
    %88 = vmatprep.subr.bf16.mxu0 0
    %89 = vmatpush1.bf16.msra.mxu0 0
    %90 = vmatprep.subr.bf16.mxu0 0
    %91 = vmatpush1.bf16.msra.mxu0 0
    %92 = vmatprep.subr.bf16.mxu0 0
    %93 = vmatpush1.bf16.msra.mxu0 %v73
    %94 = vmatprep.subr.bf16.mxu0 0
    %95 = vmatpush1.bf16.msra.mxu0 %v72
    %96 = vmatprep.subr.bf16.mxu0 0
    %97 = vmatpush2.bf16.msra.mxu0 0
    %98 = vmatprep.subr.bf16.mxu0 0
    %99 = vmatpush2.bf16.msra.mxu0 0
    %100 = vmatprep.subr.bf16.mxu0 0
    %101 = vmatpush2.bf16.msra.mxu0 0
    %102 = vmatprep.subr.bf16.mxu0 0
    %103 = vmatpush2.bf16.msra.mxu0 0
    %104 = vmatprep.subr.bf16.mxu0 0
    %105 = vmatpush2.bf16.msra.mxu0 0
    %106 = vmatprep.subr.bf16.mxu0 0
    %107 = vmatpush2.bf16.msra.mxu0 0
    %108 = vmatprep.subr.bf16.mxu0 0
    %109 = vmatpush2.bf16.msra.mxu0 0
    %110 = vmatprep.subr.bf16.mxu0 0
    %111 = vmatpush2.bf16.msra.mxu0 0
    %112 = vmatprep.mubr.bf16.mxu0 0
    %113 = vmatmul.mubr.bf16.gmra.mxu0 %v78
    %v114 = vpop.f32.mrf.mxu0
    %v115 = vadd.f32 0.0, %v114
    %v116 = vpop.f32.mrf.mxu0
    %v117 = vpop.f32.mrf.mxu0
    %v118 = vadd.f32 0.0, %v117
    %v119 = vpop.f32.mrf.mxu0
    %120 = vdwg.mxu0
    %v121 = vadd.f32 %v51, %v115
    %v122 = vadd.f32 %v52, %v118
    %vm123 = vcmask 785408
    %124 = vst.msk [vmem:[#allocation2] sm:$0xff] %vm123, %v121
    %125 = vst.msk [vmem:[#allocation2 + $0x8] sm:$0xff] %vm123, %v122
    // Predicated region
    $region26: #{tpu_custom_call.1} parent=1 // pred_check
      %p126 = pneg %p44
    $region27: #{tpu_custom_call.1} parent=1 // pred_check_branch
      %128 = sbr.rel (%p126) target = $region29
    $region28: #{tpu_custom_call.1} parent=1 // pred_region
      %v129 = vld [vmem:[#allocation2] sm:$0xff]
      %v130 = vld [vmem:[#allocation2 + $0x8] sm:$0xff]
      %v131 = vld [vmem:[%s2] sm:$0x1]
      %v133 = vlaneseq
      %v134 = vshrl.u32 %v133, 7
      %v135 = vsub.s32 0, %v134
      %v136 = vrot.slane %v131, %v135
      %v138 = vadd.f32 %v129, %v136
      %v139 = vadd.f32 %v130, %v136
      %v140 = vpack.c.bf16 %v139, %v138
      %v142 = vunpack.c.l.b16 %v140
      %v143 = vunpack.c.h.b16 %v140
      %v144 = vpack.c.b16 %v142, %v142
      %v145 = vpack.c.b16 %v143, %v143
      %vm148 = vcmask 781312
      %149 = vst.msk [vmem:[#allocation8] sm:$0xf] %vm148, %v144
      %150 = vst.msk [vmem:[#allocation8 + $0x4] sm:$0xf] %vm148, %v145
    $region29: #{tpu_custom_call.1} parent=1 // pred_fallthru
      _
    // Predicated region
    $region30: #{tpu_custom_call.1} parent=1 // pred_check
      _
    $region31: #{tpu_custom_call.1} parent=1 // pred_check_branch
      %152 = sbr.rel (0) target = $region33
    $region32: #{tpu_custom_call.1} parent=1 // pred_region
      %s154 = ssub.s32 128, 128
      %155 = vsyncadd [#allocation5], %s154
      %s156 = sshll.u32 [#allocation8], 4
      %s157 = int_to_ptr.vmem [resolvable:$true] %s156
      %162 = dma.vmem_to_hbm [thread:$0]  %s157, 128, %s3, [#allocation5], 64, 64, 4
    $region33: #{tpu_custom_call.1} parent=1 // pred_fallthru
      _
    // Predicated region
    $region34: #{tpu_custom_call.1} parent=1 // pred_check
      _
    $region35: #{tpu_custom_call.1} parent=1 // pred_check_branch
      %164 = sbr.rel (0) target = $region37
    $region36: #{tpu_custom_call.1} parent=1 // pred_region
      %165 = dma.done [#allocation5], 128
    $region37: #{tpu_custom_call.1} parent=1 // pred_fallthru
      _
    %166 = vsyncpa [#allocation4], 1
    %167 = vsyncpa [#allocation7], 1
    %168 = vsyncpa [#allocation5], 1

</llo_original>
